<compile_context>
chip_gen: v6e
topology: v6e:2x2x1
jax: 0.10.0
libtpu: 0.0.40
codegen_flags: <defaults>
</compile_context>

<pallas_src>
import functools

import jax
import jax.numpy as jnp
from jax.experimental import pallas as pl
from jax.experimental.pallas import tpu as pltpu

_MIB = 1024 * 1024


def _round_up(x, m):
    return ((x + m - 1) // m) * m


def _cdiv(a, b):
    return (a + b - 1) // b


def _vmem_limit_bytes():
    """Generation-aware VMEM limit: ~3/4 of physical per-core VMEM.

    v5e/v6e (128 MiB) -> 96 MiB; v7x (64 MiB/TC) -> 48 MiB.
    Falls back to the conservative 48 MiB if the query is unavailable.
    """
    cap = 64 * _MIB
    try:
        info = pltpu.get_tpu_info()
        cap = int(getattr(info, "vmem_capacity_bytes", cap))
    except Exception:
        pass
    return max(32 * _MIB, min((cap * 3) // 4, 96 * _MIB))


def _invariant_spec(block_shape):
    """BlockSpec for a grid-invariant operand: constant index_map and, when
    supported, a single VMEM buffer (Pallas double-buffers inputs by default,
    which would silently double the resident weight footprint)."""
    index_map = lambda *_: (0,) * len(block_shape)
    try:
        return pl.BlockSpec(block_shape, index_map,
                            pipeline_mode=pl.Buffered(1))
    except (TypeError, AttributeError):  # older jax without pipeline_mode
        return pl.BlockSpec(block_shape, index_map)


def _choose_block_rows(n, per_row_bytes, fixed_bytes, limit_bytes):
    """Largest MXU-friendly row tile that fits the VMEM budget.

    Multiples of 128 (MXU M dim), floor 128, cap 1024.  Small problems get a
    single 8-row-aligned tile.  Large problems are capped so the row grid has
    >= ~4 steps (megacore sharing on v7x + pipeline overlap).
    """
    n_pad = _round_up(n, 8)
    if n_pad <= 128:
        return n_pad
    avail = max(limit_bytes - fixed_bytes, 0)
    tm = avail // max(per_row_bytes, 1)
    tm = max(128, min((tm // 128) * 128, 1024))
    if n_pad > 4 * 128:
        tm = min(tm, _round_up(_cdiv(n_pad, 4), 128))
    return min(tm, _round_up(n_pad, 128))


# ----------------------------- LN math (f32) --------------------------------
def _layernorm_rows(x_f32, gamma_f32, beta_f32, eps):
    # One-pass moments: var = E[x^2] - E[x]^2.  Numerically fine at LN scales
    # and drops the full (rows, D) centered temporary / shortens the
    # XLU-reduction dependency chain.
    mean = jnp.mean(x_f32, axis=-1, keepdims=True)
    mean_sq = jnp.mean(x_f32 * x_f32, axis=-1, keepdims=True)
    var = jnp.maximum(mean_sq - mean * mean, 0.0)
    inv = jax.lax.rsqrt(var + eps)
    return (x_f32 - mean) * inv * gamma_f32 + beta_f32


# -------------------- fused LayerNorm + Linear (whole W) --------------------
def _prenorm_linear_whole_w_kernel(x_ref, gamma_ref, beta_ref, w_ref, b_ref,
                                   o_ref, *, eps, d_out):
    # NOTE: when n % block_rows != 0 the trailing rows of this tile are Pallas
    # boundary padding; their LN stats are garbage but those rows are masked
    # on writeback, so they never reach HBM.  LN is purely row-wise, so no
    # cross-row contamination.
    x = x_ref[...].astype(jnp.float32)
    y = _layernorm_rows(x, gamma_ref[...].astype(jnp.float32),
                        beta_ref[...].astype(jnp.float32), eps)
    y = y.astype(w_ref.dtype)                      # native MXU operand dtype
    acc = jnp.dot(y, w_ref[...], preferred_element_type=jnp.float32)
    acc = acc + b_ref[...].astype(jnp.float32)
    # Drop lane padding in-register; store width equals the true d_out so no
    # post-kernel HBM slice is needed.
    o_ref[...] = acc[:, :d_out].astype(o_ref.dtype)


def _fused_whole_w(x2d, gamma2d, beta2d, w_pad, b2d_pad, d_out, *, eps,
                   vmem_limit, block_rows=None):
    n, d = x2d.shape
    d_out_p = w_pad.shape[1]
    x_bytes = jnp.dtype(x2d.dtype).itemsize
    w_bytes = jnp.dtype(w_pad.dtype).itemsize
    o_bytes = x_bytes

    if block_rows is None:
        # Single-buffered W + bias (Buffered(1)) + gamma/beta.
        fixed = (d * d_out_p + d_out_p) * w_bytes + 2 * d * 4
        # Double-buffered x + out tiles, plus live f32 temporaries.
        per_row = 2 * d * x_bytes + 2 * d_out * o_bytes + 4 * (3 * d + d_out_p)
        block_rows = _choose_block_rows(n, per_row, fixed, vmem_limit)

    cost = pl.CostEstimate(
        flops=2 * n * d * d_out_p + 10 * n * d,
        transcendentals=n,
        bytes_accessed=n * d * x_bytes + d * d_out_p * w_bytes
        + n * d_out * o_bytes,
    )
    return pl.pallas_call(
        functools.partial(_prenorm_linear_whole_w_kernel, eps=eps,
                          d_out=d_out),
        out_shape=jax.ShapeDtypeStruct((n, d_out), x2d.dtype),
        grid_spec=pltpu.PrefetchScalarGridSpec(
            num_scalar_prefetch=0,
            grid=(_cdiv(n, block_rows),),
            in_specs=[
                pl.BlockSpec((block_rows, d), lambda i: (i, 0)),   # x tile
                _invariant_spec((1, d)),                           # gamma
                _invariant_spec((1, d)),                           # beta
                _invariant_spec((d, d_out_p)),                     # W (resident)
                _invariant_spec((1, d_out_p)),                     # bias
            ],
            out_specs=pl.BlockSpec((block_rows, d_out), lambda i: (i, 0)),
        ),
        compiler_params=pltpu.CompilerParams(
            dimension_semantics=("parallel",),
            vmem_limit_bytes=vmem_limit,
        ),
        cost_estimate=cost,
    )(x2d, gamma2d, beta2d, w_pad, b2d_pad)


# --------- fused LayerNorm + Linear, N-tiled (large-weight fallback) --------
def _prenorm_linear_ntiled_kernel(x_ref, gamma_ref, beta_ref, w_ref, b_ref,
                                  o_ref, y_scratch, *, eps):
    # Compute LN once per row tile (first output-column tile) and cache it in
    # VMEM scratch; subsequent column tiles only run the matmul.
    @pl.when(pl.program_id(1) == 0)
    def _():
        x = x_ref[...].astype(jnp.float32)
        y = _layernorm_rows(x, gamma_ref[...].astype(jnp.float32),
                            beta_ref[...].astype(jnp.float32), eps)
        y_scratch[...] = y.astype(y_scratch.dtype)

    acc = jnp.dot(y_scratch[...], w_ref[...],
                  preferred_element_type=jnp.float32)
    acc = acc + b_ref[...].astype(jnp.float32)
    o_ref[...] = acc.astype(o_ref.dtype)


def _fused_ntiled(x2d, gamma2d, beta2d, w, b2d, *, eps, vmem_limit,
                  block_rows=None, n_block=None):
    n, d = x2d.shape
    d_out = w.shape[1]
    x_bytes = jnp.dtype(x2d.dtype).itemsize
    w_bytes = jnp.dtype(w.dtype).itemsize
    o_bytes = x_bytes

    if n_block is None:
        n_block = 512
    n_block = min(n_block, _round_up(d_out, 128))
    n_block = max(128, (n_block // 128) * 128)

    if block_rows is None:
        # Double-buffered W / bias column tiles + gamma/beta (single-buffered).
        fixed = 2 * (d * n_block + n_block) * w_bytes + 2 * d * 4
        # Per row: dbuf x + dbuf out tile + LN scratch + f32 temporaries.
        per_row = (2 * d * x_bytes + 2 * n_block * o_bytes + d * w_bytes
                   + 4 * (3 * d + n_block))
        block_rows = _choose_block_rows(n, per_row, fixed, vmem_limit)

    cost = pl.CostEstimate(
        flops=2 * n * d * d_out + 10 * n * d,
        transcendentals=n,
        bytes_accessed=n * d * x_bytes + d * d_out * w_bytes
        + n * d_out * o_bytes,
    )
    return pl.pallas_call(
        functools.partial(_prenorm_linear_ntiled_kernel, eps=eps),
        out_shape=jax.ShapeDtypeStruct((n, d_out), x2d.dtype),
        grid_spec=pltpu.PrefetchScalarGridSpec(
            num_scalar_prefetch=0,
            grid=(_cdiv(n, block_rows), _cdiv(d_out, n_block)),
            in_specs=[
                pl.BlockSpec((block_rows, d), lambda i, j: (i, 0)),  # x tile
                _invariant_spec((1, d)),                             # gamma
                _invariant_spec((1, d)),                             # beta
                pl.BlockSpec((d, n_block), lambda i, j: (0, j)),     # W cols
                pl.BlockSpec((1, n_block), lambda i, j: (0, j)),     # bias
            ],
            out_specs=pl.BlockSpec((block_rows, n_block),
                                   lambda i, j: (i, j)),
            scratch_shapes=[pltpu.VMEM((block_rows, d), w.dtype)],
        ),
        compiler_params=pltpu.CompilerParams(
            dimension_semantics=("parallel", "arbitrary"),
            vmem_limit_bytes=vmem_limit,
        ),
        cost_estimate=cost,
    )(x2d, gamma2d, beta2d, w, b2d)


# -------------------- standalone LayerNorm (generic fn path) ----------------
def _layernorm_kernel(x_ref, gamma_ref, beta_ref, o_ref, *, eps):
    x = x_ref[...].astype(jnp.float32)
    y = _layernorm_rows(x, gamma_ref[...].astype(jnp.float32),
                        beta_ref[...].astype(jnp.float32), eps)
    o_ref[...] = y.astype(o_ref.dtype)


def layernorm_pallas(x2d, gamma, beta, *, eps=1e-5, block_rows=None,
                     vmem_limit_bytes=None):
    n, d = x2d.shape
    limit = (vmem_limit_bytes if vmem_limit_bytes is not None
             else _vmem_limit_bytes())
    gamma2d = gamma.reshape(1, d)
    beta2d = beta.reshape(1, d)
    x_bytes = jnp.dtype(x2d.dtype).itemsize
    if block_rows is None:
        fixed = 2 * d * 4
        per_row = 2 * 2 * d * x_bytes + 4 * 2 * d  # dbuf in+out, f32 temps
        n_pad = _round_up(n, 8)
        tm = max(limit - fixed, 0) // max(per_row, 1)
        tm = max(8, min((tm // 8) * 8, 2048))
        block_rows = min(tm, n_pad)
    cost = pl.CostEstimate(
        flops=10 * n * d,
        transcendentals=n,
        bytes_accessed=2 * n * d * x_bytes + 2 * d * 4,
    )
    return pl.pallas_call(
        functools.partial(_layernorm_kernel, eps=eps),
        out_shape=jax.ShapeDtypeStruct((n, d), x2d.dtype),
        grid_spec=pltpu.PrefetchScalarGridSpec(
            num_scalar_prefetch=0,
            grid=(_cdiv(n, block_rows),),
            in_specs=[
                pl.BlockSpec((block_rows, d), lambda i: (i, 0)),
                _invariant_spec((1, d)),
                _invariant_spec((1, d)),
            ],
            out_specs=pl.BlockSpec((block_rows, d), lambda i: (i, 0)),
        ),
        compiler_params=pltpu.CompilerParams(
            dimension_semantics=("parallel",),
            vmem_limit_bytes=limit,
        ),
        cost_estimate=cost,
    )(x2d, gamma2d, beta2d)


# ---------------------------------- modules ---------------------------------
class PallasLinear:
    """Param container for a Linear `fn`, pre-prepared for fusion.

    Weight padding (lane-dense multiple of 128 output columns) and the bias
    reshapes happen ONCE here, not per forward call.  `compute_dtype` (e.g.
    jnp.bfloat16) optionally stores W in a faster MXU operand dtype.
    """

    def __init__(self, w, b, *, compute_dtype=None, force_n_tiled=False,
                 n_block=None):
        d_in, d_out = w.shape
        if compute_dtype is not None:
            w = w.astype(compute_dtype)
        self.w = w
        self.b = b
        self.d_in = d_in
        self.d_out = d_out
        self.d_out_p = _round_up(d_out, 128)
        self.force_n_tiled = force_n_tiled
        self.n_block = n_block
        if self.d_out_p != d_out:
            self.w_pad = jnp.pad(w, ((0, 0), (0, self.d_out_p - d_out)))
            self.b_pad2d = jnp.pad(
                b, ((0, self.d_out_p - d_out),)).reshape(1, self.d_out_p)
        else:
            self.w_pad = w
            self.b_pad2d = b.reshape(1, d_out)
        self.b2d = b.reshape(1, d_out)

    def __call__(self, x):
        # Unfused fallback path (not used when called through PreNormPallas).
        shp = x.shape
        y = x.reshape(-1, shp[-1]).astype(self.w.dtype) @ self.w + self.b
        return y.reshape(*shp[:-1], self.d_out).astype(x.dtype)


class PreNormPallas:
    """JAX/Pallas equivalent of PreNorm(dim, fn): fn(LayerNorm(dim)(x)).

    When `fn` is a PallasLinear, LayerNorm + Linear are fused in a single
    row-tiled Pallas kernel (LN output never round-trips through HBM).  For
    weights too large to keep whole in VMEM (e.g. on v7x, 64 MiB/TC) an
    N-tiled path caches the LN result in VMEM scratch and sweeps output
    column tiles.  Trained LayerNorm params can be passed via weight=/bias=.
    """

    def __init__(self, dim, fn, *, eps=1e-5, weight=None, bias=None):
        self.dim = dim
        self.fn = fn
        self.eps = eps
        gamma = (jnp.ones((dim,), jnp.float32) if weight is None
                 else jnp.asarray(weight, jnp.float32))
        beta = (jnp.zeros((dim,), jnp.float32) if bias is None
                else jnp.asarray(bias, jnp.float32))
        # Hoisted reshapes (done once, not per call).
        self.gamma2d = gamma.reshape(1, dim)
        self.beta2d = beta.reshape(1, dim)
        self.vmem_limit = _vmem_limit_bytes()

    def __call__(self, x, **kwargs):
        orig_shape = x.shape
        x2d = x.reshape(-1, self.dim)
        if isinstance(self.fn, PallasLinear) and not kwargs:
            fn = self.fn
            w_bytes = jnp.dtype(fn.w.dtype).itemsize
            w_vmem = fn.d_in * fn.d_out_p * w_bytes
            # Whole-W path only if the single-buffered weight leaves room for
            # useful row tiles; otherwise tile the output columns.
            if not fn.force_n_tiled and w_vmem <= self.vmem_limit // 3:
                y2d = _fused_whole_w(
                    x2d, self.gamma2d, self.beta2d, fn.w_pad, fn.b_pad2d,
                    fn.d_out, eps=self.eps, vmem_limit=self.vmem_limit)
            else:
                y2d = _fused_ntiled(
                    x2d, self.gamma2d, self.beta2d, fn.w, fn.b2d,
                    eps=self.eps, vmem_limit=self.vmem_limit,
                    n_block=fn.n_block)
            return y2d.reshape(*orig_shape[:-1], fn.d_out)
        # Generic fn: Pallas LayerNorm, then call fn.
        # TODO(synk): arbitrary `fn` bodies cannot be fused into the kernel.
        y2d = layernorm_pallas(x2d, self.gamma2d, self.beta2d, eps=self.eps)
        return self.fn(y2d.reshape(orig_shape), **kwargs)


if __name__ == "__main__":
    key = jax.random.PRNGKey(0)

    # ---- Test 1: small ViT-token shapes, whole-W fused path ---------------
    B, S, D = 2, 8, 32
    kx, kw, kb, kg = jax.random.split(key, 4)
    x = jax.random.normal(kx, (B, S, D), dtype=jnp.float32)
    w = jax.random.normal(kw, (D, D), dtype=jnp.float32) * 0.02
    b = jax.random.normal(kb, (D,), dtype=jnp.float32) * 0.02

    prenorm = PreNormPallas(D, PallasLinear(w, b))
    out = jax.block_until_ready(prenorm(x))

    mean = jnp.mean(x, axis=-1, keepdims=True)
    var = jnp.mean((x - mean) ** 2, axis=-1, keepdims=True)
    ref = (x - mean) / jnp.sqrt(var + 1e-5)      # gamma=1, beta=0 default
    ref = ref @ w + b
    assert out.shape == (B, S, D)
    assert jnp.allclose(out, ref, atol=1e-4, rtol=1e-4), "whole-W mismatch"

    # ---- Test 2: N-tiled fallback path with trained LayerNorm params ------
    B2, S2, D2, DOUT2 = 4, 64, 256, 512
    kx2, kw2, kb2, kg2, kbe2 = jax.random.split(kg, 5)
    x2 = jax.random.normal(kx2, (B2, S2, D2), dtype=jnp.float32)
    w2 = jax.random.normal(kw2, (D2, DOUT2), dtype=jnp.float32) * 0.02
    b2 = jax.random.normal(kb2, (DOUT2,), dtype=jnp.float32) * 0.02
    g2 = 1.0 + 0.1 * jax.random.normal(kg2, (D2,), dtype=jnp.float32)
    be2 = 0.1 * jax.random.normal(kbe2, (D2,), dtype=jnp.float32)

    prenorm2 = PreNormPallas(
        D2, PallasLinear(w2, b2, force_n_tiled=True, n_block=256),
        weight=g2, bias=be2)
    out2 = jax.block_until_ready(prenorm2(x2))

    mean2 = jnp.mean(x2, axis=-1, keepdims=True)
    var2 = jnp.mean((x2 - mean2) ** 2, axis=-1, keepdims=True)
    ref2 = (x2 - mean2) / jnp.sqrt(var2 + 1e-5) * g2 + be2
    ref2 = jnp.dot(ref2, w2, precision=jax.lax.Precision.HIGHEST) + b2
    assert out2.shape == (B2, S2, DOUT2)
    assert jnp.allclose(out2, ref2, atol=5e-3, rtol=5e-3), "N-tiled mismatch"

    print("KERNEL_OK")
</pallas_src>

<mosaic_0001>
module attributes {stable_mosaic.version = 11 : i64} {
  func.func @_prenorm_linear_whole_w_kernel(%arg0: i32, %arg1: memref<16x32xf32, #tpu.memory_space<vmem>>, %arg2: memref<1x32xf32, #tpu.memory_space<vmem>>, %arg3: memref<1x32xf32, #tpu.memory_space<vmem>>, %arg4: memref<32x128xf32, #tpu.memory_space<vmem>>, %arg5: memref<1x128xf32, #tpu.memory_space<vmem>>, %arg6: memref<16x32xf32, #tpu.memory_space<vmem>>) attributes {dimension_semantics = [#tpu.dimension_semantics<parallel>], iteration_bounds = array<i64: 1>, scalar_prefetch = 0 : i64, scratch_operands = 0 : i64, tpu.core_type = #tpu.core_type<tc>, window_params = [{transform_indices = @transform_0, window_bounds = array<i64: 16, 32>}, {pipeline_mode = #tpu.pipeline_mode<synchronous>, transform_indices = @transform_1, window_bounds = array<i64: 1, 32>}, {pipeline_mode = #tpu.pipeline_mode<synchronous>, transform_indices = @transform_2, window_bounds = array<i64: 1, 32>}, {pipeline_mode = #tpu.pipeline_mode<synchronous>, transform_indices = @transform_3, window_bounds = array<i64: 32, 128>}, {pipeline_mode = #tpu.pipeline_mode<synchronous>, transform_indices = @transform_4, window_bounds = array<i64: 1, 128>}, {transform_indices = @transform_5, window_bounds = array<i64: 16, 32>}]} {
    %c0 = arith.constant 0 : index
    %c0_0 = arith.constant 0 : index
    %0 = vector.load %arg1[%c0, %c0_0] : memref<16x32xf32, #tpu.memory_space<vmem>>, vector<16x32xf32>
    %c0_1 = arith.constant 0 : index
    %c0_2 = arith.constant 0 : index
    %1 = vector.load %arg2[%c0_1, %c0_2] : memref<1x32xf32, #tpu.memory_space<vmem>>, vector<1x32xf32>
    %c0_3 = arith.constant 0 : index
    %c0_4 = arith.constant 0 : index
    %2 = vector.load %arg3[%c0_3, %c0_4] : memref<1x32xf32, #tpu.memory_space<vmem>>, vector<1x32xf32>
    %cst = arith.constant dense<0.000000e+00> : vector<16xf32>
    %3 = vector.multi_reduction <add>, %0, %cst [1] : vector<16x32xf32> to vector<16xf32>
    %4 = vector.shape_cast %3 : vector<16xf32> to vector<16x1xf32>
    %cst_5 = arith.constant 3.200000e+01 : f32
    %5 = vector.broadcast %cst_5 : f32 to vector<16x1xf32>
    %6 = arith.divf %4, %5 : vector<16x1xf32>
    %7 = arith.mulf %0, %0 : vector<16x32xf32>
    %cst_6 = arith.constant dense<0.000000e+00> : vector<16xf32>
    %8 = vector.multi_reduction <add>, %7, %cst_6 [1] : vector<16x32xf32> to vector<16xf32>
    %9 = vector.shape_cast %8 : vector<16xf32> to vector<16x1xf32>
    %cst_7 = arith.constant 3.200000e+01 : f32
    %10 = vector.broadcast %cst_7 : f32 to vector<16x1xf32>
    %11 = arith.divf %9, %10 : vector<16x1xf32>
    %12 = arith.mulf %6, %6 : vector<16x1xf32>
    %13 = arith.subf %11, %12 : vector<16x1xf32>
    %cst_8 = arith.constant 0.000000e+00 : f32
    %14 = vector.broadcast %cst_8 : f32 to vector<16x1xf32>
    %15 = arith.maximumf %13, %14 : vector<16x1xf32>
    %cst_9 = arith.constant 9.99999974E-6 : f32
    %16 = vector.broadcast %cst_9 : f32 to vector<16x1xf32>
    %17 = arith.addf %15, %16 : vector<16x1xf32>
    %18 = math.rsqrt %17 : vector<16x1xf32>
    %19 = vector.broadcast %6 : vector<16x1xf32> to vector<16x32xf32>
    %20 = arith.subf %0, %19 : vector<16x32xf32>
    %21 = vector.broadcast %18 : vector<16x1xf32> to vector<16x32xf32>
    %22 = arith.mulf %20, %21 : vector<16x32xf32>
    %23 = vector.broadcast %1 : vector<1x32xf32> to vector<16x32xf32>
    %24 = arith.mulf %22, %23 : vector<16x32xf32>
    %25 = vector.broadcast %2 : vector<1x32xf32> to vector<16x32xf32>
    %26 = arith.addf %24, %25 : vector<16x32xf32>
    %c0_10 = arith.constant 0 : index
    %c0_11 = arith.constant 0 : index
    %27 = vector.load %arg4[%c0_10, %c0_11] : memref<32x128xf32, #tpu.memory_space<vmem>>, vector<32x128xf32>
    %cst_12 = arith.constant dense<0.000000e+00> : vector<16x128xf32>
    %28 = tpu.matmul %26, %27, %cst_12 {dimension_numbers = #tpu.dot_dimension_numbers<[1], [0], [0], [1], [0, 0, 1, 1], [], []>} : vector<16x32xf32>, vector<32x128xf32>, vector<16x128xf32> -> vector<16x128xf32>
    %c0_13 = arith.constant 0 : index
    %c0_14 = arith.constant 0 : index
    %29 = vector.load %arg5[%c0_13, %c0_14] : memref<1x128xf32, #tpu.memory_space<vmem>>, vector<1x128xf32>
    %30 = vector.broadcast %29 : vector<1x128xf32> to vector<16x128xf32>
    %31 = arith.addf %28, %30 : vector<16x128xf32>
    %32 = vector.extract_strided_slice %31 {offsets = [0, 0], sizes = [16, 32], strides = [1, 1]} : vector<16x128xf32> to vector<16x32xf32>
    %c0_15 = arith.constant 0 : index
    %c0_16 = arith.constant 0 : index
    %33 = vector.load %arg6[%c0_15, %c0_16] : memref<16x32xf32, #tpu.memory_space<vmem>>, vector<16x32xf32>
    tpu.vector_store %arg6[%c0_15, %c0_16], %32 {strides = array<i32>} : memref<16x32xf32, #tpu.memory_space<vmem>>, vector<16x32xf32>,
    return
  }
  func.func @transform_0(%arg0: i32) -> (i32, i32) {
    %c0_i32 = arith.constant 0 : i32
    %c0_i32_0 = arith.constant 0 : i32
    return %arg0, %c0_i32 : i32, i32
  }
  func.func @transform_1(%arg0: i32) -> (i32, i32) {
    %c0_i32 = arith.constant 0 : i32
    %c0_i32_0 = arith.constant 0 : i32
    %c0_i32_1 = arith.constant 0 : i32
    return %c0_i32, %c0_i32_0 : i32, i32
  }
  func.func @transform_2(%arg0: i32) -> (i32, i32) {
    %c0_i32 = arith.constant 0 : i32
    %c0_i32_0 = arith.constant 0 : i32
    %c0_i32_1 = arith.constant 0 : i32
    return %c0_i32, %c0_i32_0 : i32, i32
  }
  func.func @transform_3(%arg0: i32) -> (i32, i32) {
    %c0_i32 = arith.constant 0 : i32
    %c0_i32_0 = arith.constant 0 : i32
    %c0_i32_1 = arith.constant 0 : i32
    return %c0_i32, %c0_i32_0 : i32, i32
  }
  func.func @transform_4(%arg0: i32) -> (i32, i32) {
    %c0_i32 = arith.constant 0 : i32
    %c0_i32_0 = arith.constant 0 : i32
    %c0_i32_1 = arith.constant 0 : i32
    return %c0_i32, %c0_i32_0 : i32, i32
  }
  func.func @transform_5(%arg0: i32) -> (i32, i32) {
    %c0_i32 = arith.constant 0 : i32
    %c0_i32_0 = arith.constant 0 : i32
    return %arg0, %c0_i32 : i32, i32
  }
}

</mosaic_0001>

<llo_original>
// kernel: tpu_custom_call.1
$region0: #{tpu_custom_call.1}
  #allocation0 [shape = 'u32[]', space=smem, size = 0x4, offset = 0x4, fixed_abs, tag = 'smem constant byte address 0x4 - core index']
  #allocation1 [shape = 'u32[144,128]{1,0:T(1,128)}', space=vmem, size = 0x12000, scoped, tag = 'internal scratch']
  %s0 = inlined_call_operand.hbm [shape: f32[16,32], index: 0, kind: input, shape index: {}]
  %s1 = inlined_call_operand.vmem [shape: f32[1,32], index: 1, kind: input, shape index: {}]
  %s2 = inlined_call_operand.vmem [shape: f32[1,32], index: 2, kind: input, shape index: {}]
  %s3 = inlined_call_operand.hbm [shape: f32[32,128], index: 3, kind: input, shape index: {}]
  %s4 = inlined_call_operand.vmem [shape: f32[1,128], index: 4, kind: input, shape index: {}]
  %s5 = inlined_call_operand.hbm [shape: f32[16,32], index: 5, kind: output, shape index: {}]
  %s6 = sld [smem:[#allocation0]]
  $region38: #{tpu_custom_call.1} parent=0
    _
  %s8 = ssub.s32 1, %s6
  %s9 = scalar_select 0, %s8, %s6
  $region1: #{tpu_custom_call.1} parent=0
    #allocation2 [shape = 'u8[8192]{0}', space=vmem, size = 0x2000, scoped, tag = 'input window, operand 0, single buffered']
    #allocation3 [shape = 's32[1]{0}', space=sflag, size = 0x4, scoped, tag = 'scoped memory for tpu_custom_call.1']
    #allocation4 [shape = 's32[1]{0}', space=sflag, size = 0x4, scoped, tag = 'scoped memory for tpu_custom_call.1']
    #allocation5 [shape = 'u8[16384]{0}', space=vmem, size = 0x4000, scoped, tag = 'input window, operand 3, single buffered']
    #allocation6 [shape = 's32[1]{0}', space=sflag, size = 0x4, scoped, tag = 'scoped memory for tpu_custom_call.1']
    #allocation7 [shape = 'u8[8192]{0}', space=vmem, size = 0x2000, scoped, tag = 'output window, operand 0, single buffered']
    %10 = vsyncpa [#allocation3], 0
    %11 = vsyncpa [#allocation6], 0
    %12 = vsyncpa [#allocation4], 0
    // Predicated region
    $region2: #{tpu_custom_call.1} parent=1 // pred_check
      _
    $region3: #{tpu_custom_call.1} parent=1 // pred_check_branch
      %14 = sbr.rel (0) target = $region5
    $region4: #{tpu_custom_call.1} parent=1 // pred_region
      %s16 = ssub.s32 256, 256
      %17 = vsyncadd [#allocation3], %s16
      %s18 = sshll.u32 [#allocation2], 4
      %s19 = int_to_ptr.vmem [resolvable:$true] %s18
      %24 = dma.hbm_to_vmem [thread:$0]  %s0, 256, %s19, [#allocation3], 128, 128, 8
    $region5: #{tpu_custom_call.1} parent=1 // pred_fallthru
      _
    // Predicated region
    $region6: #{tpu_custom_call.1} parent=1 // pred_check
      _
    $region7: #{tpu_custom_call.1} parent=1 // pred_check_branch
      %26 = sbr.rel (0) target = $region9
    $region8: #{tpu_custom_call.1} parent=1 // pred_region
      _
    $region9: #{tpu_custom_call.1} parent=1 // pred_fallthru
      _
    // Predicated region
    $region10: #{tpu_custom_call.1} parent=1 // pred_check
      _
    $region11: #{tpu_custom_call.1} parent=1 // pred_check_branch
      %28 = sbr.rel (0) target = $region13
    $region12: #{tpu_custom_call.1} parent=1 // pred_region
      _
    $region13: #{tpu_custom_call.1} parent=1 // pred_fallthru
      _
    // Predicated region
    $region14: #{tpu_custom_call.1} parent=1 // pred_check
      _
    $region15: #{tpu_custom_call.1} parent=1 // pred_check_branch
      %30 = sbr.rel (0) target = $region17
    $region16: #{tpu_custom_call.1} parent=1 // pred_region
      %s32 = ssub.s32 512, 512
      %33 = vsyncadd [#allocation6], %s32
      %s34 = sshll.u32 [#allocation5], 4
      %s35 = int_to_ptr.vmem [resolvable:$true] %s34
      %40 = dma.hbm_to_vmem [thread:$0]  %s3, 512, %s35, [#allocation6], 128, 128, 8
    $region17: #{tpu_custom_call.1} parent=1 // pred_fallthru
      _
    // Predicated region
    $region18: #{tpu_custom_call.1} parent=1 // pred_check
      _
    $region19: #{tpu_custom_call.1} parent=1 // pred_check_branch
      %42 = sbr.rel (0) target = $region21
    $region20: #{tpu_custom_call.1} parent=1 // pred_region
      _
    $region21: #{tpu_custom_call.1} parent=1 // pred_fallthru
      _
    // Predicated region
    $region22: #{tpu_custom_call.1} parent=1 // pred_check
      _
    $region23: #{tpu_custom_call.1} parent=1 // pred_check_branch
      %44 = sbr.rel (0) target = $region25
    $region24: #{tpu_custom_call.1} parent=1 // pred_region
      %45 = dma.done [#allocation3], 256
    $region25: #{tpu_custom_call.1} parent=1 // pred_fallthru
      _
    // Predicated region
    $region26: #{tpu_custom_call.1} parent=1 // pred_check
      _
    $region27: #{tpu_custom_call.1} parent=1 // pred_check_branch
      %47 = sbr.rel (0) target = $region29
    $region28: #{tpu_custom_call.1} parent=1 // pred_region
      %48 = dma.done [#allocation6], 512
    $region29: #{tpu_custom_call.1} parent=1 // pred_fallthru
      _
    %v49 = vld [vmem:[#allocation2] sm:$0xff]
    %v50 = vld [vmem:[#allocation2 + $0x8] sm:$0xff]
    %v51 = vld [vmem:[%s1] sm:$0x1]
    %v52 = vld [vmem:[%s2] sm:$0x1]
    %vm53 = vcmask 261120
    %v54 = vsel %vm53, %v49, 0.0
    %55 = vadd.xlane.f32.xlu0 %v54
    %v56 = vpop.xlane.xlu0 %55
    %v57 = vsel %vm53, %v50, 0.0
    %58 = vadd.xlane.f32.xlu0 %v57
    %v59 = vpop.xlane.xlu0 %58
    %v60 = vrcp.pop 32.0
    %v61 = vmul.f32 %v56, %v60
    %v62 = vmul.f32 %v59, %v60
    %v63 = vmul.f32 %v49, %v49
    %v64 = vmul.f32 %v50, %v50
    %v65 = vsel %vm53, %v63, 0.0
    %66 = vadd.xlane.f32.xlu0 %v65
    %v67 = vpop.xlane.xlu0 %66
    %v68 = vsel %vm53, %v64, 0.0
    %69 = vadd.xlane.f32.xlu0 %v68
    %v70 = vpop.xlane.xlu0 %69
    %v71 = vmul.f32 %v67, %v60
    %v72 = vmul.f32 %v70, %v60
    %v73 = vmul.f32 %v61, %v61
    %v74 = vmul.f32 %v62, %v62
    %v75 = vsub.f32 %v71, %v73
    %v76 = vsub.f32 %v72, %v74
    %v77 = vmax.f32 %v75, 0.0
    %v78 = vmax.f32 %v76, 0.0
    %v79 = vadd.f32 %v77, 1e-05
    %v80 = vadd.f32 %v78, 1e-05
    %v81 = vrsqrt.pop %v79
    %v82 = vrsqrt.pop %v80
    %v83 = vsub.f32 %v49, %v61
    %v84 = vsub.f32 %v50, %v62
    %v85 = vmul.f32 %v83, %v81
    %v86 = vmul.f32 %v84, %v82
    %v88 = vlaneseq
    %v89 = vshrl.u32 %v88, 7
    %v90 = vsub.s32 0, %v89
    %v91 = vrot.slane %v51, %v90
    %v93 = vmul.f32 %v85, %v91
    %v94 = vmul.f32 %v86, %v91
    %v96 = vlaneseq
    %v97 = vshrl.u32 %v96, 7
    %v98 = vsub.s32 0, %v97
    %v99 = vrot.slane %v52, %v98
    %v101 = vadd.f32 %v93, %v99
    %v102 = vadd.f32 %v94, %v99
    %v103 = vld [vmem:[#allocation5] sm:$0xff]
    %v104 = vld [vmem:[#allocation5 + $0x8] sm:$0xff]
    %v105 = vld [vmem:[#allocation5 + $0x10] sm:$0xff]
    %v106 = vld [vmem:[#allocation5 + $0x18] sm:$0xff]
    %v107 = vld [vmem:[%s4] sm:$0x1]
    %v109 = vlaneseq
    %v110 = vshrl.u32 %v109, 7
    %v111 = vsub.s32 0, %v110
    %v112 = vrot.slane %v107, %v111
    %v115 = vsel %vm53, %v101, 0
    %v118 = vsel %vm53, %v102, 0
    %120 = vmatprep.subr.mxu0 0.0
    %121 = vmatpush1.msra.mxu0 0.0
    %122 = vmatprep.subr.mxu0 0.0
    %123 = vmatpush1.msra.mxu0 0.0
    %124 = vmatprep.subr.mxu0 0.0
    %125 = vmatpush1.msra.mxu0 0.0
    %126 = vmatprep.subr.mxu0 0.0
    %127 = vmatpush1.msra.mxu0 0.0
    %128 = vmatprep.subr.mxu0 0.0
    %129 = vmatpush1.msra.mxu0 0.0
    %130 = vmatprep.subr.mxu0 0.0
    %131 = vmatpush1.msra.mxu0 0.0
    %132 = vmatprep.subr.mxu0 0.0
    %133 = vmatpush1.msra.mxu0 0.0
    %134 = vmatprep.subr.mxu0 0.0
    %135 = vmatpush1.msra.mxu0 0.0
    %136 = vmatprep.subr.mxu0 0.0
    %137 = vmatpush1.msra.mxu0 0.0
    %138 = vmatprep.subr.mxu0 0.0
    %139 = vmatpush1.msra.mxu0 0.0
    %140 = vmatprep.subr.mxu0 0.0
    %141 = vmatpush1.msra.mxu0 0.0
    %142 = vmatprep.subr.mxu0 0.0
    %143 = vmatpush1.msra.mxu0 0.0
    %144 = vmatprep.subr.mxu0 0.0
    %145 = vmatpush1.msra.mxu0 %v106
    %146 = vmatprep.subr.mxu0 0.0
    %147 = vmatpush1.msra.mxu0 %v105
    %148 = vmatprep.subr.mxu0 0.0
    %149 = vmatpush1.msra.mxu0 %v104
    %150 = vmatprep.subr.mxu0 0.0
    %151 = vmatpush1.msra.mxu0 %v103
    %152 = vmatprep.subr.mxu0 0.0
    %153 = vmatpush2.msra.mxu0 0.0
    %154 = vmatprep.subr.mxu0 0.0
    %155 = vmatpush2.msra.mxu0 0.0
    %156 = vmatprep.subr.mxu0 0.0
    %157 = vmatpush2.msra.mxu0 0.0
    %158 = vmatprep.subr.mxu0 0.0
    %159 = vmatpush2.msra.mxu0 0.0
    %160 = vmatprep.subr.mxu0 0.0
    %161 = vmatpush2.msra.mxu0 0.0
    %162 = vmatprep.subr.mxu0 0.0
    %163 = vmatpush2.msra.mxu0 0.0
    %164 = vmatprep.subr.mxu0 0.0
    %165 = vmatpush2.msra.mxu0 0.0
    %166 = vmatprep.subr.mxu0 0.0
    %167 = vmatpush2.msra.mxu0 0.0
    %168 = vmatprep.subr.mxu0 0.0
    %169 = vmatpush2.msra.mxu0 0.0
    %170 = vmatprep.subr.mxu0 0.0
    %171 = vmatpush2.msra.mxu0 0.0
    %172 = vmatprep.subr.mxu0 0.0
    %173 = vmatpush2.msra.mxu0 0.0
    %174 = vmatprep.subr.mxu0 0.0
    %175 = vmatpush2.msra.mxu0 0.0
    %176 = vmatprep.subr.mxu0 0.0
    %177 = vmatpush2.msra.mxu0 0.0
    %178 = vmatprep.subr.mxu0 0.0
    %179 = vmatpush2.msra.mxu0 0.0
    %180 = vmatprep.subr.mxu0 0.0
    %181 = vmatpush2.msra.mxu0 0.0
    %182 = vmatprep.subr.mxu0 0.0
    %183 = vmatpush2.msra.mxu0 0.0
    %184 = vmatprep.mubr.f32.mxu0 0.0
    %185 = vmatmul.mubr.f32.gmra.mxu0 %v115
    %v186 = vpop.f32.mrf.mxu0
    %v187 = vadd.f32 %v112, %v186
    %v188 = vpop.f32.mrf.mxu0
    %189 = vmatprep.mubr.f32.mxu0 0.0
    %190 = vmatmul.mubr.f32.gmra.mxu0 %v118
    %v191 = vpop.f32.mrf.mxu0
    %v192 = vadd.f32 %v112, %v191
    %v193 = vpop.f32.mrf.mxu0
    %194 = vdwg.mxu0
    %195 = vst.msk [vmem:[#allocation7] sm:$0xff] %vm53, %v187
    %196 = vst.msk [vmem:[#allocation7 + $0x8] sm:$0xff] %vm53, %v192
    // Predicated region
    $region30: #{tpu_custom_call.1} parent=1 // pred_check
      _
    $region31: #{tpu_custom_call.1} parent=1 // pred_check_branch
      %198 = sbr.rel (0) target = $region33
    $region32: #{tpu_custom_call.1} parent=1 // pred_region
      %s200 = ssub.s32 256, 256
      %201 = vsyncadd [#allocation4], %s200
      %s202 = sshll.u32 [#allocation7], 4
      %s203 = int_to_ptr.vmem [resolvable:$true] %s202
      %208 = dma.vmem_to_hbm [thread:$0]  %s203, 256, %s5, [#allocation4], 128, 128, 8
    $region33: #{tpu_custom_call.1} parent=1 // pred_fallthru
      _
    // Predicated region
    $region34: #{tpu_custom_call.1} parent=1 // pred_check
      _
    $region35: #{tpu_custom_call.1} parent=1 // pred_check_branch
      %210 = sbr.rel (0) target = $region37
    $region36: #{tpu_custom_call.1} parent=1 // pred_region
      %211 = dma.done [#allocation4], 256
    $region37: #{tpu_custom_call.1} parent=1 // pred_fallthru
      _
    %212 = vsyncpa [#allocation3], 1
    %213 = vsyncpa [#allocation6], 1
    %214 = vsyncpa [#allocation4], 1

</llo_original>
